<compile_context>
chip_gen: v6e
topology: v6e:2x2x1
jax: 0.10.0
libtpu: 0.0.40
codegen_flags: <defaults>
</compile_context>

<pallas_src>
import functools

import jax
import jax.numpy as jnp
from jax.experimental import pallas as pl
from jax.experimental.pallas import tpu as pltpu

_TARGET_TILE_BYTES = 4 * 1024 * 1024      # ~4 MiB input tile per grid step
_SMALL_BYTES = 512 * 1024                 # below this, plain jnp.clip is faster
_WIDTHS = (32768, 16384, 8192, 4096, 2048, 1024, 512, 256, 128)


def _clamp_kernel(x_ref, o_ref, *, min_val, max_val):
    # Pure VPU elementwise work on the whole VMEM tile; bounds are immediates
    # (weak-typed Python scalars -> no dtype promotion, no per-iter broadcasts).
    v = x_ref[...]
    if min_val is not None:
        v = jnp.maximum(v, min_val)
    if max_val is not None:
        v = jnp.minimum(v, max_val)
    o_ref[...] = v


def _sublane(itemsize):
    # Sublane packing: 8 for 4-byte, 16 for 2-byte, 32 for 1-byte dtypes.
    return max(8, 32 // itemsize)


def _vmem_limit_bytes():
    try:
        info = pltpu.get_tpu_info()
        cap = int(getattr(info, "vmem_capacity_bytes", 64 * 1024 * 1024))
    except Exception:
        cap = 64 * 1024 * 1024  # v7x per-TC minimum; safe lower bound
    # Leave ~16 MiB headroom for Mosaic internals; never request > 64 MiB.
    return max(32 * 1024 * 1024, min(cap - 16 * 1024 * 1024, 64 * 1024 * 1024))


def _choose_width(n, sub):
    """Widest lane-dense last dim (multiple of 128) dividing n.

    Prefers widths that leave >= 2*sub rows so the grid has at least two
    sublane-aligned steps (lets both v7x TensorCores stream).
    """
    for w in _WIDTHS:
        if n % w == 0 and (n // w) >= 2 * sub:
            return w
    for w in _WIDTHS:
        if n % w == 0:
            return w
    return None


def _block_rows(rows, width, itemsize, sub, target_bytes):
    if rows <= sub:
        return rows  # full first-dim extent: single block, layout rule satisfied
    br = max(sub, (target_bytes // (width * itemsize)) // sub * sub)
    br = min(br, (rows // sub) * sub)
    if rows >= 2 * sub:
        # Guarantee >= 2 grid steps so ("parallel",) shards across both v7x TCs.
        half = (rows // 2) // sub * sub
        br = min(br, max(sub, half))
    return max(br, sub)


def _clamp_2d(x2d, min_val, max_val):
    """Run the clamp kernel on a (rows, width) slab; width % 128 == 0."""
    rows, width = x2d.shape
    itemsize = jnp.dtype(x2d.dtype).itemsize
    sub = _sublane(itemsize)
    block_rows = _block_rows(rows, width, itemsize, sub, _TARGET_TILE_BYTES)
    grid = (pl.cdiv(rows, block_rows),)
    kernel = functools.partial(_clamp_kernel, min_val=min_val, max_val=max_val)
    return pl.pallas_call(
        kernel,
        out_shape=jax.ShapeDtypeStruct((rows, width), x2d.dtype),
        grid=grid,
        in_specs=[pl.BlockSpec((block_rows, width), lambda i: (i, 0))],
        out_specs=pl.BlockSpec((block_rows, width), lambda i: (i, 0)),
        compiler_params=pltpu.CompilerParams(
            dimension_semantics=("parallel",),
            vmem_limit_bytes=_vmem_limit_bytes(),
        ),
    )(x2d)


def _cast_bounds(dtype, min_val, max_val):
    def cast(v):
        if v is None:
            return None
        if jnp.issubdtype(dtype, jnp.integer):
            return int(v)
        return float(v)
    return cast(min_val), cast(max_val)


def clamp_pallas(x, min_val=0.0, max_val=1.0):
    """Clamp x (any shape/dtype) to [min_val, max_val]; mirrors torch.clamp."""
    if x.size == 0:
        return x
    min_b, max_b = _cast_bounds(x.dtype, min_val, max_val)
    n = x.size
    itemsize = jnp.dtype(x.dtype).itemsize

    # Tiny tensors: pallas_call dispatch overhead dominates and blocks XLA
    # fusion with neighbors; plain jnp.clip is strictly better here.
    if n * itemsize <= _SMALL_BYTES:
        return jnp.clip(x, min_b, max_b)

    orig_shape = x.shape
    sub = _sublane(itemsize)
    width = _choose_width(n, sub)
    if width is not None:
        # Free reshape of a contiguous array: no extra HBM passes.
        x2d = jnp.reshape(x, (n // width, width))
        return jnp.reshape(_clamp_2d(x2d, min_b, max_b), orig_shape)

    # Ragged size (not a multiple of 128): run the kernel on the aligned
    # prefix and clip the <128-element remainder with jnp -- avoids the
    # full-tensor pad + slice (2 extra HBM passes) of the old fallback.
    # TODO(synk): replace the concatenate with an in-kernel masked tail store.
    flat = jnp.reshape(x, (-1,))
    prefix = (n // 128) * 128
    if prefix == 0:
        return jnp.clip(x, min_b, max_b)
    w = _choose_width(prefix, sub)
    head = jnp.reshape(flat[:prefix], (prefix // w, w))
    head_out = jnp.reshape(_clamp_2d(head, min_b, max_b), (-1,))
    tail_out = jnp.clip(flat[prefix:], min_b, max_b)
    return jnp.reshape(jnp.concatenate([head_out, tail_out]), orig_shape)


if __name__ == "__main__":
    key = jax.random.PRNGKey(0)
    k0, k1, k2, k3 = jax.random.split(key, 4)

    # 1) Small NCHW input consistent with the module's forward (fast jnp path).
    x = jax.random.normal(k0, (2, 4, 16, 16), dtype=jnp.float32) * 2.0
    y = clamp_pallas(x, min_val=0.0, max_val=1.0)
    jax.block_until_ready(y)
    assert y.shape == x.shape and y.dtype == x.dtype
    assert jnp.allclose(y, jnp.clip(x, 0.0, 1.0)), "mismatch (small path)"

    # 2) Larger float input that exercises the Pallas kernel (>= 2 grid steps).
    xl = jax.random.normal(k1, (4, 8, 64, 128), dtype=jnp.float32) * 2.0
    yl = clamp_pallas(xl, min_val=0.0, max_val=1.0)
    jax.block_until_ready(yl)
    assert jnp.allclose(yl, jnp.clip(xl, 0.0, 1.0)), "mismatch (kernel path)"

    # 3) Integer dtype through the kernel path (bounds cast to int, no promote).
    xi = jax.random.randint(k2, (4, 8, 64, 128), -3, 4, dtype=jnp.int32)
    yi = clamp_pallas(xi, min_val=0.0, max_val=1.0)
    jax.block_until_ready(yi)
    assert yi.dtype == xi.dtype
    assert jnp.array_equal(yi, jnp.clip(xi, 0, 1)), "mismatch (int kernel path)"

    # 4) Ragged size (not a multiple of 128): aligned-prefix kernel + jnp tail.
    xr = jax.random.normal(k3, (262147,), dtype=jnp.float32) * 2.0
    yr = clamp_pallas(xr, min_val=0.0, max_val=1.0)
    jax.block_until_ready(yr)
    assert jnp.allclose(yr, jnp.clip(xr, 0.0, 1.0)), "mismatch (ragged path)"

    print("KERNEL_OK")
</pallas_src>

<mosaic_0001>
module attributes {stable_mosaic.version = 11 : i64} {
  func.func @_clamp_kernel(%arg0: i32, %arg1: memref<8x16384xf32, #tpu.memory_space<vmem>>, %arg2: memref<8x16384xf32, #tpu.memory_space<vmem>>) attributes {dimension_semantics = [#tpu.dimension_semantics<parallel>], iteration_bounds = array<i64: 2>, scalar_prefetch = 0 : i64, scratch_operands = 0 : i64, tpu.core_type = #tpu.core_type<tc>, window_params = [{transform_indices = @transform_0, window_bounds = array<i64: 8, 16384>}, {transform_indices = @transform_1, window_bounds = array<i64: 8, 16384>}]} {
    %c0 = arith.constant 0 : index
    %c0_0 = arith.constant 0 : index
    %0 = vector.load %arg1[%c0, %c0_0] : memref<8x16384xf32, #tpu.memory_space<vmem>>, vector<8x16384xf32>
    %cst = arith.constant 0.000000e+00 : f32
    %1 = vector.broadcast %cst : f32 to vector<8x16384xf32>
    %2 = arith.maximumf %0, %1 : vector<8x16384xf32>
    %cst_1 = arith.constant 1.000000e+00 : f32
    %3 = vector.broadcast %cst_1 : f32 to vector<8x16384xf32>
    %4 = arith.minimumf %2, %3 : vector<8x16384xf32>
    %c0_2 = arith.constant 0 : index
    %c0_3 = arith.constant 0 : index
    %5 = vector.load %arg2[%c0_2, %c0_3] : memref<8x16384xf32, #tpu.memory_space<vmem>>, vector<8x16384xf32>
    tpu.vector_store %arg2[%c0_2, %c0_3], %4 {strides = array<i32>} : memref<8x16384xf32, #tpu.memory_space<vmem>>, vector<8x16384xf32>,
    return
  }
  func.func @transform_0(%arg0: i32) -> (i32, i32) {
    %c0_i32 = arith.constant 0 : i32
    %c0_i32_0 = arith.constant 0 : i32
    return %arg0, %c0_i32 : i32, i32
  }
  func.func @transform_1(%arg0: i32) -> (i32, i32) {
    %c0_i32 = arith.constant 0 : i32
    %c0_i32_0 = arith.constant 0 : i32
    return %arg0, %c0_i32 : i32, i32
  }
}

</mosaic_0001>

<llo_original>
// kernel: tpu_custom_call.1
$region0: #{tpu_custom_call.1}
  #allocation0 [shape = 'u32[]', space=smem, size = 0x4, offset = 0x4, fixed_abs, tag = 'smem constant byte address 0x4 - core index']
  #allocation1 [shape = 'u32[144,128]{1,0:T(1,128)}', space=vmem, size = 0x12000, scoped, tag = 'internal scratch']
  %s0 = inlined_call_operand.hbm [shape: f32[16,16384], index: 0, kind: input, shape index: {}]
  %s1 = inlined_call_operand.hbm [shape: f32[16,16384], index: 1, kind: output, shape index: {}]
  %s2 = sld [smem:[#allocation0]]
  $region41: #{tpu_custom_call.1} parent=0
    _
  %s4 = ssub.s32 1, %s2
  %s5 = scalar_select 0, %s4, %s2
  $region1: #{tpu_custom_call.1} parent=0
    #allocation2 [shape = 'u8[1048576]{0}', space=vmem, size = 0x100000, scoped, tag = 'input window, operand 0']
    #allocation3 [shape = 's32[2]{0}', space=sflag, size = 0x8, scoped, tag = 'scoped memory for tpu_custom_call.1']
    #allocation4 [shape = 's32[2]{0}', space=sflag, size = 0x8, scoped, tag = 'scoped memory for tpu_custom_call.1']
    #allocation5 [shape = 'u8[1048576]{0}', space=vmem, size = 0x100000, scoped, tag = 'output window, operand 0']
    %6 = vsyncpa [#allocation3], 0
    %s7 = scalar_lea.sflag [#allocation3], 1
    %8 = vsyncpa %s7, 0
    %9 = vsyncpa [#allocation4], 0
    %s10 = scalar_lea.sflag [#allocation4], 1
    %11 = vsyncpa %s10, 0
    loop: start=0, step=1, limit=4
    $region2: #{tpu_custom_call.1} parent=1 // loop_pre_header
      _
    $region3: #{tpu_custom_call.1} parent=1 // loop_header
      %s13 = sphi 0, %s17
      %p14 = scmp.ge.s32.totalorder %s13, 4
      %s23 = sphi 0, %s25
      %s26 = sphi 0, %s23
      %s27 = sphi 0, %s26
      %s43 = sphi 0, %s27
      %s49 = sphi 0, %s51
      %s52 = sphi 0, %s49
      %s53 = sphi 0, %s52
      %s69 = sphi 0, %s53
    $region4: #{tpu_custom_call.1} parent=1 // loop_header_branch
      %16 = sbr.rel (%p14) target = $region8
    $region5: #{tpu_custom_call.1} parent=1 // loop_body
      %s18 = ssub.s32 %s13, 1
      %s19 = ssub.s32 %s13, 2
      %s20 = sadd.s32 %s13, 1
      %s21 = ssub.s32 %s13, %s20
      %p22 = scmp.eq.s32.totalorder %s21, 0
      %s24 = sadd.s32 %s23, 1
      %s25 = scalar_select %p22, %s23, %s24
      %p28 = pneg %p22
      %p29 = scmp.eq.s32.totalorder %s13, 1
      %p30 = por %p28, %p29
      %p31 = scmp.ne.s32.totalorder %s23, %s26
      %p32 = scmp.eq.s32.totalorder %s13, 0
      %p33 = por %p31, %p32
      %p34 = scmp.ne.s32.totalorder %s23, %s26
      %p35 = scmp.eq.s32.totalorder %s18, 1
      %p36 = por %p34, %p35
      %p37 = scmp.ne.s32.totalorder %s26, %s27
      %p38 = scmp.eq.s32.totalorder %s18, 0
      %p39 = por %p37, %p38
      %p40 = scmp.ne.s32.totalorder %s26, %s27
      %p41 = scmp.eq.s32.totalorder %s19, 1
      %p42 = por %p40, %p41
      %p44 = scmp.ne.s32.totalorder %s27, %s43
      %p45 = scmp.eq.s32.totalorder %s19, 0
      %p46 = por %p44, %p45
      %s47 = ssub.s32 %s13, %s20
      %p48 = scmp.eq.s32.totalorder %s47, 0
      %s50 = sadd.s32 %s49, 1
      %s51 = scalar_select %p48, %s49, %s50
      %p54 = pneg %p48
      %p55 = scmp.eq.s32.totalorder %s13, 1
      %p56 = por %p54, %p55
      %p57 = scmp.ne.s32.totalorder %s49, %s52
      %p58 = scmp.eq.s32.totalorder %s13, 0
      %p59 = por %p57, %p58
      %p60 = scmp.ne.s32.totalorder %s49, %s52
      %p61 = scmp.eq.s32.totalorder %s18, 1
      %p62 = por %p60, %p61
      %p63 = scmp.ne.s32.totalorder %s52, %s53
      %p64 = scmp.eq.s32.totalorder %s18, 0
      %p65 = por %p63, %p64
      %p66 = scmp.ne.s32.totalorder %s52, %s53
      %p67 = scmp.eq.s32.totalorder %s19, 1
      %p68 = por %p66, %p67
      %p70 = scmp.ne.s32.totalorder %s53, %s69
      %p71 = scmp.eq.s32.totalorder %s19, 0
      %p72 = por %p70, %p71
      %p73 = scmp.le.s32.totalorder 1, %s13
      %p74 = scmp.lt.s32.totalorder %s13, 3
      %p75 = pnand %p73, %p74
      %p76 = pneg %p75
      // Predicated region
      $region9: #{tpu_custom_call.1} parent=5 // pred_check
        _
      $region10: #{tpu_custom_call.1} parent=5 // pred_check_branch
        %78 = sbr.rel (%p75) target = $region12
      $region11: #{tpu_custom_call.1} parent=5 // pred_region
        %s79 = ssub.s32 %s13, 1
      $region12: #{tpu_custom_call.1} parent=5 // pred_fallthru
        _
      %p80 = scmp.lt.s32.totalorder %s13, 2
      // Predicated region
      $region13: #{tpu_custom_call.1} parent=5 // pred_check
        %p81 = pneg %p80
      $region14: #{tpu_custom_call.1} parent=5 // pred_check_branch
        %83 = sbr.rel (%p81) target = $region16
      $region15: #{tpu_custom_call.1} parent=5 // pred_region
        // Predicated region
        $region17: #{tpu_custom_call.1} parent=15 // pred_check
          %p84 = pneg %p33
        $region18: #{tpu_custom_call.1} parent=15 // pred_check_branch
          %86 = sbr.rel (%p84) target = $region20
        $region19: #{tpu_custom_call.1} parent=15 // pred_region
          %s87 = sand.u32 %s23, 1
          %s88 = scalar_lea.sflag [#allocation3], %s87
          %s89 = sand.u32 %s23, 1
          %s90 = smul.addr %s89, 1024
          %s91 = scalar_lea.vmem [#allocation2], %s90
          %s93 = ssub.s32 16384, 16384
          %94 = vsyncadd %s88, %s93
          %s95 = smul.addr %s13, 128
          %s96 = smul.addr %s95, 128
          %s97 = scalar_lea.hbm %s0, %s96
          %s99 = sshll.u32 %s91, 4
          %s100 = int_to_ptr.vmem [resolvable:$true] %s99
          %102 = dma.hbm_to_vmem [thread:$0]  %s97, 16384, %s100, %s88
        $region20: #{tpu_custom_call.1} parent=15 // pred_fallthru
          _
      $region16: #{tpu_custom_call.1} parent=5 // pred_fallthru
        _
      %p103 = scmp.le.s32.totalorder 1, %s13
      %p104 = scmp.lt.s32.totalorder %s13, 3
      %p105 = pnand %p103, %p104
      %p106 = pneg %p105
      // Predicated region
      $region21: #{tpu_custom_call.1} parent=5 // pred_check
        _
      $region22: #{tpu_custom_call.1} parent=5 // pred_check_branch
        %108 = sbr.rel (%p105) target = $region24
      $region23: #{tpu_custom_call.1} parent=5 // pred_region
        %s109 = ssub.s32 %s13, 1
        %s110 = sand.u32 %s26, 1
        %s111 = scalar_lea.sflag [#allocation3], %s110
        %s112 = sand.u32 %s26, 1
        %s113 = smul.addr %s112, 1024
        %s114 = scalar_lea.vmem [#allocation2], %s113
        // Predicated region
        $region25: #{tpu_custom_call.1} parent=23 // pred_check
          %p115 = pneg %p39
        $region26: #{tpu_custom_call.1} parent=23 // pred_check_branch
          %117 = sbr.rel (%p115) target = $region28
        $region27: #{tpu_custom_call.1} parent=23 // pred_region
          %118 = dma.done %s111, 16384
        $region28: #{tpu_custom_call.1} parent=23 // pred_fallthru
          _
        %s119 = sand.u32 %s26, 1
        %s120 = scalar_lea.sflag [#allocation3], %s119
        %s121 = sand.u32 %s26, 1
        %s122 = smul.addr %s121, 1024
        %s123 = scalar_lea.vmem [#allocation2], %s122
        %p124 = pneg %p39
        %p125 = pneg %p36
        %p126 = pneg %p65
        %p127 = pneg %p62
        %s128 = sand.u32 %s52, 1
        %s129 = scalar_lea.sflag [#allocation4], %s128
        %s130 = sand.u32 %s52, 1
        %s131 = smul.addr %s130, 1024
        %s132 = scalar_lea.vmem [#allocation5], %s131
        %v133 = vld [vmem:[%s114] sm:$0xff]
        %v134 = vld [vmem:[%s114 + $0x8] sm:$0xff]
        %v135 = vld [vmem:[%s114 + $0x10] sm:$0xff]
        %v136 = vld [vmem:[%s114 + $0x18] sm:$0xff]
        %v137 = vld [vmem:[%s114 + $0x20] sm:$0xff]
        %v138 = vld [vmem:[%s114 + $0x28] sm:$0xff]
        %v139 = vld [vmem:[%s114 + $0x30] sm:$0xff]
        %v140 = vld [vmem:[%s114 + $0x38] sm:$0xff]
        %v141 = vld [vmem:[%s114 + $0x40] sm:$0xff]
        %v142 = vld [vmem:[%s114 + $0x48] sm:$0xff]
        %v143 = vld [vmem:[%s114 + $0x50] sm:$0xff]
        %v144 = vld [vmem:[%s114 + $0x58] sm:$0xff]
        %v145 = vld [vmem:[%s114 + $0x60] sm:$0xff]
        %v146 = vld [vmem:[%s114 + $0x68] sm:$0xff]
        %v147 = vld [vmem:[%s114 + $0x70] sm:$0xff]
        %v148 = vld [vmem:[%s114 + $0x78] sm:$0xff]
        %v149 = vld [vmem:[%s114 + $0x80] sm:$0xff]
        %v150 = vld [vmem:[%s114 + $0x88] sm:$0xff]
        %v151 = vld [vmem:[%s114 + $0x90] sm:$0xff]
        %v152 = vld [vmem:[%s114 + $0x98] sm:$0xff]
        %v153 = vld [vmem:[%s114 + $0xa0] sm:$0xff]
        %v154 = vld [vmem:[%s114 + $0xa8] sm:$0xff]
        %v155 = vld [vmem:[%s114 + $0xb0] sm:$0xff]
        %v156 = vld [vmem:[%s114 + $0xb8] sm:$0xff]
        %v157 = vld [vmem:[%s114 + $0xc0] sm:$0xff]
        %v158 = vld [vmem:[%s114 + $0xc8] sm:$0xff]
        %v159 = vld [vmem:[%s114 + $0xd0] sm:$0xff]
        %v160 = vld [vmem:[%s114 + $0xd8] sm:$0xff]
        %v161 = vld [vmem:[%s114 + $0xe0] sm:$0xff]
        %v162 = vld [vmem:[%s114 + $0xe8] sm:$0xff]
        %v163 = vld [vmem:[%s114 + $0xf0] sm:$0xff]
        %v164 = vld [vmem:[%s114 + $0xf8] sm:$0xff]
        %v165 = vld [vmem:[%s114 + $0x100] sm:$0xff]
        %v166 = vld [vmem:[%s114 + $0x108] sm:$0xff]
        %v167 = vld [vmem:[%s114 + $0x110] sm:$0xff]
        %v168 = vld [vmem:[%s114 + $0x118] sm:$0xff]
        %v169 = vld [vmem:[%s114 + $0x120] sm:$0xff]
        %v170 = vld [vmem:[%s114 + $0x128] sm:$0xff]
        %v171 = vld [vmem:[%s114 + $0x130] sm:$0xff]
        %v172 = vld [vmem:[%s114 + $0x138] sm:$0xff]
        %v173 = vld [vmem:[%s114 + $0x140] sm:$0xff]
        %v174 = vld [vmem:[%s114 + $0x148] sm:$0xff]
        %v175 = vld [vmem:[%s114 + $0x150] sm:$0xff]
        %v176 = vld [vmem:[%s114 + $0x158] sm:$0xff]
        %v177 = vld [vmem:[%s114 + $0x160] sm:$0xff]
        %v178 = vld [vmem:[%s114 + $0x168] sm:$0xff]
        %v179 = vld [vmem:[%s114 + $0x170] sm:$0xff]
        %v180 = vld [vmem:[%s114 + $0x178] sm:$0xff]
        %v181 = vld [vmem:[%s114 + $0x180] sm:$0xff]
        %v182 = vld [vmem:[%s114 + $0x188] sm:$0xff]
        %v183 = vld [vmem:[%s114 + $0x190] sm:$0xff]
        %v184 = vld [vmem:[%s114 + $0x198] sm:$0xff]
        %v185 = vld [vmem:[%s114 + $0x1a0] sm:$0xff]
        %v186 = vld [vmem:[%s114 + $0x1a8] sm:$0xff]
        %v187 = vld [vmem:[%s114 + $0x1b0] sm:$0xff]
        %v188 = vld [vmem:[%s114 + $0x1b8] sm:$0xff]
        %v189 = vld [vmem:[%s114 + $0x1c0] sm:$0xff]
        %v190 = vld [vmem:[%s114 + $0x1c8] sm:$0xff]
        %v191 = vld [vmem:[%s114 + $0x1d0] sm:$0xff]
        %v192 = vld [vmem:[%s114 + $0x1d8] sm:$0xff]
        %v193 = vld [vmem:[%s114 + $0x1e0] sm:$0xff]
        %v194 = vld [vmem:[%s114 + $0x1e8] sm:$0xff]
        %v195 = vld [vmem:[%s114 + $0x1f0] sm:$0xff]
        %v196 = vld [vmem:[%s114 + $0x1f8] sm:$0xff]
        %v197 = vld [vmem:[%s114 + $0x200] sm:$0xff]
        %v198 = vld [vmem:[%s114 + $0x208] sm:$0xff]
        %v199 = vld [vmem:[%s114 + $0x210] sm:$0xff]
        %v200 = vld [vmem:[%s114 + $0x218] sm:$0xff]
        %v201 = vld [vmem:[%s114 + $0x220] sm:$0xff]
        %v202 = vld [vmem:[%s114 + $0x228] sm:$0xff]
        %v203 = vld [vmem:[%s114 + $0x230] sm:$0xff]
        %v204 = vld [vmem:[%s114 + $0x238] sm:$0xff]
        %v205 = vld [vmem:[%s114 + $0x240] sm:$0xff]
        %v206 = vld [vmem:[%s114 + $0x248] sm:$0xff]
        %v207 = vld [vmem:[%s114 + $0x250] sm:$0xff]
        %v208 = vld [vmem:[%s114 + $0x258] sm:$0xff]
        %v209 = vld [vmem:[%s114 + $0x260] sm:$0xff]
        %v210 = vld [vmem:[%s114 + $0x268] sm:$0xff]
        %v211 = vld [vmem:[%s114 + $0x270] sm:$0xff]
        %v212 = vld [vmem:[%s114 + $0x278] sm:$0xff]
        %v213 = vld [vmem:[%s114 + $0x280] sm:$0xff]
        %v214 = vld [vmem:[%s114 + $0x288] sm:$0xff]
        %v215 = vld [vmem:[%s114 + $0x290] sm:$0xff]
        %v216 = vld [vmem:[%s114 + $0x298] sm:$0xff]
        %v217 = vld [vmem:[%s114 + $0x2a0] sm:$0xff]
        %v218 = vld [vmem:[%s114 + $0x2a8] sm:$0xff]
        %v219 = vld [vmem:[%s114 + $0x2b0] sm:$0xff]
        %v220 = vld [vmem:[%s114 + $0x2b8] sm:$0xff]
        %v221 = vld [vmem:[%s114 + $0x2c0] sm:$0xff]
        %v222 = vld [vmem:[%s114 + $0x2c8] sm:$0xff]
        %v223 = vld [vmem:[%s114 + $0x2d0] sm:$0xff]
        %v224 = vld [vmem:[%s114 + $0x2d8] sm:$0xff]
        %v225 = vld [vmem:[%s114 + $0x2e0] sm:$0xff]
        %v226 = vld [vmem:[%s114 + $0x2e8] sm:$0xff]
        %v227 = vld [vmem:[%s114 + $0x2f0] sm:$0xff]
        %v228 = vld [vmem:[%s114 + $0x2f8] sm:$0xff]
        %v229 = vld [vmem:[%s114 + $0x300] sm:$0xff]
        %v230 = vld [vmem:[%s114 + $0x308] sm:$0xff]
        %v231 = vld [vmem:[%s114 + $0x310] sm:$0xff]
        %v232 = vld [vmem:[%s114 + $0x318] sm:$0xff]
        %v233 = vld [vmem:[%s114 + $0x320] sm:$0xff]
        %v234 = vld [vmem:[%s114 + $0x328] sm:$0xff]
        %v235 = vld [vmem:[%s114 + $0x330] sm:$0xff]
        %v236 = vld [vmem:[%s114 + $0x338] sm:$0xff]
        %v237 = vld [vmem:[%s114 + $0x340] sm:$0xff]
        %v238 = vld [vmem:[%s114 + $0x348] sm:$0xff]
        %v239 = vld [vmem:[%s114 + $0x350] sm:$0xff]
        %v240 = vld [vmem:[%s114 + $0x358] sm:$0xff]
        %v241 = vld [vmem:[%s114 + $0x360] sm:$0xff]
        %v242 = vld [vmem:[%s114 + $0x368] sm:$0xff]
        %v243 = vld [vmem:[%s114 + $0x370] sm:$0xff]
        %v244 = vld [vmem:[%s114 + $0x378] sm:$0xff]
        %v245 = vld [vmem:[%s114 + $0x380] sm:$0xff]
        %v246 = vld [vmem:[%s114 + $0x388] sm:$0xff]
        %v247 = vld [vmem:[%s114 + $0x390] sm:$0xff]
        %v248 = vld [vmem:[%s114 + $0x398] sm:$0xff]
        %v249 = vld [vmem:[%s114 + $0x3a0] sm:$0xff]
        %v250 = vld [vmem:[%s114 + $0x3a8] sm:$0xff]
        %v251 = vld [vmem:[%s114 + $0x3b0] sm:$0xff]
        %v252 = vld [vmem:[%s114 + $0x3b8] sm:$0xff]
        %v253 = vld [vmem:[%s114 + $0x3c0] sm:$0xff]
        %v254 = vld [vmem:[%s114 + $0x3c8] sm:$0xff]
        %v255 = vld [vmem:[%s114 + $0x3d0] sm:$0xff]
        %v256 = vld [vmem:[%s114 + $0x3d8] sm:$0xff]
        %v257 = vld [vmem:[%s114 + $0x3e0] sm:$0xff]
        %v258 = vld [vmem:[%s114 + $0x3e8] sm:$0xff]
        %v259 = vld [vmem:[%s114 + $0x3f0] sm:$0xff]
        %v260 = vld [vmem:[%s114 + $0x3f8] sm:$0xff]
        %v261 = vmax.f32 %v133, 0.0
        %v262 = vmax.f32 %v134, 0.0
        %v263 = vmax.f32 %v135, 0.0
        %v264 = vmax.f32 %v136, 0.0
        %v265 = vmax.f32 %v137, 0.0
        %v266 = vmax.f32 %v138, 0.0
        %v267 = vmax.f32 %v139, 0.0
        %v268 = vmax.f32 %v140, 0.0
        %v269 = vmax.f32 %v141, 0.0
        %v270 = vmax.f32 %v142, 0.0
        %v271 = vmax.f32 %v143, 0.0
        %v272 = vmax.f32 %v144, 0.0
        %v273 = vmax.f32 %v145, 0.0
        %v274 = vmax.f32 %v146, 0.0
        %v275 = vmax.f32 %v147, 0.0
        %v276 = vmax.f32 %v148, 0.0
        %v277 = vmax.f32 %v149, 0.0
        %v278 = vmax.f32 %v150, 0.0
        %v279 = vmax.f32 %v151, 0.0
        %v280 = vmax.f32 %v152, 0.0
        %v281 = vmax.f32 %v153, 0.0
        %v282 = vmax.f32 %v154, 0.0
        %v283 = vmax.f32 %v155, 0.0
        %v284 = vmax.f32 %v156, 0.0
        %v285 = vmax.f32 %v157, 0.0
        %v286 = vmax.f32 %v158, 0.0
        %v287 = vmax.f32 %v159, 0.0
        %v288 = vmax.f32 %v160, 0.0
        %v289 = vmax.f32 %v161, 0.0
        %v290 = vmax.f32 %v162, 0.0
        %v291 = vmax.f32 %v163, 0.0
        %v292 = vmax.f32 %v164, 0.0
        %v293 = vmax.f32 %v165, 0.0
        %v294 = vmax.f32 %v166, 0.0
        %v295 = vmax.f32 %v167, 0.0
        %v296 = vmax.f32 %v168, 0.0
        %v297 = vmax.f32 %v169, 0.0
        %v298 = vmax.f32 %v170, 0.0
        %v299 = vmax.f32 %v171, 0.0
        %v300 = vmax.f32 %v172, 0.0
        %v301 = vmax.f32 %v173, 0.0
        %v302 = vmax.f32 %v174, 0.0
        %v303 = vmax.f32 %v175, 0.0
        %v304 = vmax.f32 %v176, 0.0
        %v305 = vmax.f32 %v177, 0.0
        %v306 = vmax.f32 %v178, 0.0
        %v307 = vmax.f32 %v179, 0.0
        %v308 = vmax.f32 %v180, 0.0
        %v309 = vmax.f32 %v181, 0.0
        %v310 = vmax.f32 %v182, 0.0
        %v311 = vmax.f32 %v183, 0.0
        %v312 = vmax.f32 %v184, 0.0
        %v313 = vmax.f32 %v185, 0.0
        %v314 = vmax.f32 %v186, 0.0
        %v315 = vmax.f32 %v187, 0.0
        %v316 = vmax.f32 %v188, 0.0
        %v317 = vmax.f32 %v189, 0.0
        %v318 = vmax.f32 %v190, 0.0
        %v319 = vmax.f32 %v191, 0.0
        %v320 = vmax.f32 %v192, 0.0
        %v321 = vmax.f32 %v193, 0.0
        %v322 = vmax.f32 %v194, 0.0
        %v323 = vmax.f32 %v195, 0.0
        %v324 = vmax.f32 %v196, 0.0
        %v325 = vmax.f32 %v197, 0.0
        %v326 = vmax.f32 %v198, 0.0
        %v327 = vmax.f32 %v199, 0.0
        %v328 = vmax.f32 %v200, 0.0
        %v329 = vmax.f32 %v201, 0.0
        %v330 = vmax.f32 %v202, 0.0
        %v331 = vmax.f32 %v203, 0.0
        %v332 = vmax.f32 %v204, 0.0
        %v333 = vmax.f32 %v205, 0.0
        %v334 = vmax.f32 %v206, 0.0
        %v335 = vmax.f32 %v207, 0.0
        %v336 = vmax.f32 %v208, 0.0
        %v337 = vmax.f32 %v209, 0.0
        %v338 = vmax.f32 %v210, 0.0
        %v339 = vmax.f32 %v211, 0.0
        %v340 = vmax.f32 %v212, 0.0
        %v341 = vmax.f32 %v213, 0.0
        %v342 = vmax.f32 %v214, 0.0
        %v343 = vmax.f32 %v215, 0.0
        %v344 = vmax.f32 %v216, 0.0
        %v345 = vmax.f32 %v217, 0.0
        %v346 = vmax.f32 %v218, 0.0
        %v347 = vmax.f32 %v219, 0.0
        %v348 = vmax.f32 %v220, 0.0
        %v349 = vmax.f32 %v221, 0.0
        %v350 = vmax.f32 %v222, 0.0
        %v351 = vmax.f32 %v223, 0.0
        %v352 = vmax.f32 %v224, 0.0
        %v353 = vmax.f32 %v225, 0.0
        %v354 = vmax.f32 %v226, 0.0
        %v355 = vmax.f32 %v227, 0.0
        %v356 = vmax.f32 %v228, 0.0
        %v357 = vmax.f32 %v229, 0.0
        %v358 = vmax.f32 %v230, 0.0
        %v359 = vmax.f32 %v231, 0.0
        %v360 = vmax.f32 %v232, 0.0
        %v361 = vmax.f32 %v233, 0.0
        %v362 = vmax.f32 %v234, 0.0
        %v363 = vmax.f32 %v235, 0.0
        %v364 = vmax.f32 %v236, 0.0
        %v365 = vmax.f32 %v237, 0.0
        %v366 = vmax.f32 %v238, 0.0
        %v367 = vmax.f32 %v239, 0.0
        %v368 = vmax.f32 %v240, 0.0
        %v369 = vmax.f32 %v241, 0.0
        %v370 = vmax.f32 %v242, 0.0
        %v371 = vmax.f32 %v243, 0.0
        %v372 = vmax.f32 %v244, 0.0
        %v373 = vmax.f32 %v245, 0.0
        %v374 = vmax.f32 %v246, 0.0
        %v375 = vmax.f32 %v247, 0.0
        %v376 = vmax.f32 %v248, 0.0
        %v377 = vmax.f32 %v249, 0.0
        %v378 = vmax.f32 %v250, 0.0
        %v379 = vmax.f32 %v251, 0.0
        %v380 = vmax.f32 %v252, 0.0
        %v381 = vmax.f32 %v253, 0.0
        %v382 = vmax.f32 %v254, 0.0
        %v383 = vmax.f32 %v255, 0.0
        %v384 = vmax.f32 %v256, 0.0
        %v385 = vmax.f32 %v257, 0.0
        %v386 = vmax.f32 %v258, 0.0
        %v387 = vmax.f32 %v259, 0.0
        %v388 = vmax.f32 %v260, 0.0
        %v389 = vmin.f32 %v261, 1.0
        %v390 = vmin.f32 %v262, 1.0
        %v391 = vmin.f32 %v263, 1.0
        %v392 = vmin.f32 %v264, 1.0
        %v393 = vmin.f32 %v265, 1.0
        %v394 = vmin.f32 %v266, 1.0
        %v395 = vmin.f32 %v267, 1.0
        %v396 = vmin.f32 %v268, 1.0
        %v397 = vmin.f32 %v269, 1.0
        %v398 = vmin.f32 %v270, 1.0
        %v399 = vmin.f32 %v271, 1.0
        %v400 = vmin.f32 %v272, 1.0
        %v401 = vmin.f32 %v273, 1.0
        %v402 = vmin.f32 %v274, 1.0
        %v403 = vmin.f32 %v275, 1.0
        %v404 = vmin.f32 %v276, 1.0
        %v405 = vmin.f32 %v277, 1.0
        %v406 = vmin.f32 %v278, 1.0
        %v407 = vmin.f32 %v279, 1.0
        %v408 = vmin.f32 %v280, 1.0
        %v409 = vmin.f32 %v281, 1.0
        %v410 = vmin.f32 %v282, 1.0
        %v411 = vmin.f32 %v283, 1.0
        %v412 = vmin.f32 %v284, 1.0
        %v413 = vmin.f32 %v285, 1.0
        %v414 = vmin.f32 %v286, 1.0
        %v415 = vmin.f32 %v287, 1.0
        %v416 = vmin.f32 %v288, 1.0
        %v417 = vmin.f32 %v289, 1.0
        %v418 = vmin.f32 %v290, 1.0
        %v419 = vmin.f32 %v291, 1.0
        %v420 = vmin.f32 %v292, 1.0
        %v421 = vmin.f32 %v293, 1.0
        %v422 = vmin.f32 %v294, 1.0
        %v423 = vmin.f32 %v295, 1.0
        %v424 = vmin.f32 %v296, 1.0
        %v425 = vmin.f32 %v297, 1.0
        %v426 = vmin.f32 %v298, 1.0
        %v427 = vmin.f32 %v299, 1.0
        %v428 = vmin.f32 %v300, 1.0
        %v429 = vmin.f32 %v301, 1.0
        %v430 = vmin.f32 %v302, 1.0
        %v431 = vmin.f32 %v303, 1.0
        %v432 = vmin.f32 %v304, 1.0
        %v433 = vmin.f32 %v305, 1.0
        %v434 = vmin.f32 %v306, 1.0
        %v435 = vmin.f32 %v307, 1.0
        %v436 = vmin.f32 %v308, 1.0
        %v437 = vmin.f32 %v309, 1.0
        %v438 = vmin.f32 %v310, 1.0
        %v439 = vmin.f32 %v311, 1.0
        %v440 = vmin.f32 %v312, 1.0
        %v441 = vmin.f32 %v313, 1.0
        %v442 = vmin.f32 %v314, 1.0
        %v443 = vmin.f32 %v315, 1.0
        %v444 = vmin.f32 %v316, 1.0
        %v445 = vmin.f32 %v317, 1.0
        %v446 = vmin.f32 %v318, 1.0
        %v447 = vmin.f32 %v319, 1.0
        %v448 = vmin.f32 %v320, 1.0
        %v449 = vmin.f32 %v321, 1.0
        %v450 = vmin.f32 %v322, 1.0
        %v451 = vmin.f32 %v323, 1.0
        %v452 = vmin.f32 %v324, 1.0
        %v453 = vmin.f32 %v325, 1.0
        %v454 = vmin.f32 %v326, 1.0
        %v455 = vmin.f32 %v327, 1.0
        %v456 = vmin.f32 %v328, 1.0
        %v457 = vmin.f32 %v329, 1.0
        %v458 = vmin.f32 %v330, 1.0
        %v459 = vmin.f32 %v331, 1.0
        %v460 = vmin.f32 %v332, 1.0
        %v461 = vmin.f32 %v333, 1.0
        %v462 = vmin.f32 %v334, 1.0
        %v463 = vmin.f32 %v335, 1.0
        %v464 = vmin.f32 %v336, 1.0
        %v465 = vmin.f32 %v337, 1.0
        %v466 = vmin.f32 %v338, 1.0
        %v467 = vmin.f32 %v339, 1.0
        %v468 = vmin.f32 %v340, 1.0
        %v469 = vmin.f32 %v341, 1.0
        %v470 = vmin.f32 %v342, 1.0
        %v471 = vmin.f32 %v343, 1.0
        %v472 = vmin.f32 %v344, 1.0
        %v473 = vmin.f32 %v345, 1.0
        %v474 = vmin.f32 %v346, 1.0
        %v475 = vmin.f32 %v347, 1.0
        %v476 = vmin.f32 %v348, 1.0
        %v477 = vmin.f32 %v349, 1.0
        %v478 = vmin.f32 %v350, 1.0
        %v479 = vmin.f32 %v351, 1.0
        %v480 = vmin.f32 %v352, 1.0
        %v481 = vmin.f32 %v353, 1.0
        %v482 = vmin.f32 %v354, 1.0
        %v483 = vmin.f32 %v355, 1.0
        %v484 = vmin.f32 %v356, 1.0
        %v485 = vmin.f32 %v357, 1.0
        %v486 = vmin.f32 %v358, 1.0
        %v487 = vmin.f32 %v359, 1.0
        %v488 = vmin.f32 %v360, 1.0
        %v489 = vmin.f32 %v361, 1.0
        %v490 = vmin.f32 %v362, 1.0
        %v491 = vmin.f32 %v363, 1.0
        %v492 = vmin.f32 %v364, 1.0
        %v493 = vmin.f32 %v365, 1.0
        %v494 = vmin.f32 %v366, 1.0
        %v495 = vmin.f32 %v367, 1.0
        %v496 = vmin.f32 %v368, 1.0
        %v497 = vmin.f32 %v369, 1.0
        %v498 = vmin.f32 %v370, 1.0
        %v499 = vmin.f32 %v371, 1.0
        %v500 = vmin.f32 %v372, 1.0
        %v501 = vmin.f32 %v373, 1.0
        %v502 = vmin.f32 %v374, 1.0
        %v503 = vmin.f32 %v375, 1.0
        %v504 = vmin.f32 %v376, 1.0
        %v505 = vmin.f32 %v377, 1.0
        %v506 = vmin.f32 %v378, 1.0
        %v507 = vmin.f32 %v379, 1.0
        %v508 = vmin.f32 %v380, 1.0
        %v509 = vmin.f32 %v381, 1.0
        %v510 = vmin.f32 %v382, 1.0
        %v511 = vmin.f32 %v383, 1.0
        %v512 = vmin.f32 %v384, 1.0
        %v513 = vmin.f32 %v385, 1.0
        %v514 = vmin.f32 %v386, 1.0
        %v515 = vmin.f32 %v387, 1.0
        %v516 = vmin.f32 %v388, 1.0
        %517 = vst [vmem:[%s132] sm:$0xff] %v389
        %518 = vst [vmem:[%s132 + $0x8] sm:$0xff] %v390
        %519 = vst [vmem:[%s132 + $0x10] sm:$0xff] %v391
        %520 = vst [vmem:[%s132 + $0x18] sm:$0xff] %v392
        %521 = vst [vmem:[%s132 + $0x20] sm:$0xff] %v393
        %522 = vst [vmem:[%s132 + $0x28] sm:$0xff] %v394
        %523 = vst [vmem:[%s132 + $0x30] sm:$0xff] %v395
        %524 = vst [vmem:[%s132 + $0x38] sm:$0xff] %v396
        %525 = vst [vmem:[%s132 + $0x40] sm:$0xff] %v397
        %526 = vst [vmem:[%s132 + $0x48] sm:$0xff] %v398
        %527 = vst [vmem:[%s132 + $0x50] sm:$0xff] %v399
        %528 = vst [vmem:[%s132 + $0x58] sm:$0xff] %v400
        %529 = vst [vmem:[%s132 + $0x60] sm:$0xff] %v401
        %530 = vst [vmem:[%s132 + $0x68] sm:$0xff] %v402
        %531 = vst [vmem:[%s132 + $0x70] sm:$0xff] %v403
        %532 = vst [vmem:[%s132 + $0x78] sm:$0xff] %v404
        %533 = vst [vmem:[%s132 + $0x80] sm:$0xff] %v405
        %534 = vst [vmem:[%s132 + $0x88] sm:$0xff] %v406
        %535 = vst [vmem:[%s132 + $0x90] sm:$0xff] %v407
        %536 = vst [vmem:[%s132 + $0x98] sm:$0xff] %v408
        %537 = vst [vmem:[%s132 + $0xa0] sm:$0xff] %v409
        %538 = vst [vmem:[%s132 + $0xa8] sm:$0xff] %v410
        %539 = vst [vmem:[%s132 + $0xb0] sm:$0xff] %v411
        %540 = vst [vmem:[%s132 + $0xb8] sm:$0xff] %v412
        %541 = vst [vmem:[%s132 + $0xc0] sm:$0xff] %v413
        %542 = vst [vmem:[%s132 + $0xc8] sm:$0xff] %v414
        %543 = vst [vmem:[%s132 + $0xd0] sm:$0xff] %v415
        %544 = vst [vmem:[%s132 + $0xd8] sm:$0xff] %v416
        %545 = vst [vmem:[%s132 + $0xe0] sm:$0xff] %v417
        %546 = vst [vmem:[%s132 + $0xe8] sm:$0xff] %v418
        %547 = vst [vmem:[%s132 + $0xf0] sm:$0xff] %v419
        %548 = vst [vmem:[%s132 + $0xf8] sm:$0xff] %v420
        %549 = vst [vmem:[%s132 + $0x100] sm:$0xff] %v421
        %550 = vst [vmem:[%s132 + $0x108] sm:$0xff] %v422
        %551 = vst [vmem:[%s132 + $0x110] sm:$0xff] %v423
        %552 = vst [vmem:[%s132 + $0x118] sm:$0xff] %v424
        %553 = vst [vmem:[%s132 + $0x120] sm:$0xff] %v425
        %554 = vst [vmem:[%s132 + $0x128] sm:$0xff] %v426
        %555 = vst [vmem:[%s132 + $0x130] sm:$0xff] %v427
        %556 = vst [vmem:[%s132 + $0x138] sm:$0xff] %v428
        %557 = vst [vmem:[%s132 + $0x140] sm:$0xff] %v429
        %558 = vst [vmem:[%s132 + $0x148] sm:$0xff] %v430
        %559 = vst [vmem:[%s132 + $0x150] sm:$0xff] %v431
        %560 = vst [vmem:[%s132 + $0x158] sm:$0xff] %v432
        %561 = vst [vmem:[%s132 + $0x160] sm:$0xff] %v433
        %562 = vst [vmem:[%s132 + $0x168] sm:$0xff] %v434
        %563 = vst [vmem:[%s132 + $0x170] sm:$0xff] %v435
        %564 = vst [vmem:[%s132 + $0x178] sm:$0xff] %v436
        %565 = vst [vmem:[%s132 + $0x180] sm:$0xff] %v437
        %566 = vst [vmem:[%s132 + $0x188] sm:$0xff] %v438
        %567 = vst [vmem:[%s132 + $0x190] sm:$0xff] %v439
        %568 = vst [vmem:[%s132 + $0x198] sm:$0xff] %v440
        %569 = vst [vmem:[%s132 + $0x1a0] sm:$0xff] %v441
        %570 = vst [vmem:[%s132 + $0x1a8] sm:$0xff] %v442
        %571 = vst [vmem:[%s132 + $0x1b0] sm:$0xff] %v443
        %572 = vst [vmem:[%s132 + $0x1b8] sm:$0xff] %v444
        %573 = vst [vmem:[%s132 + $0x1c0] sm:$0xff] %v445
        %574 = vst [vmem:[%s132 + $0x1c8] sm:$0xff] %v446
        %575 = vst [vmem:[%s132 + $0x1d0] sm:$0xff] %v447
        %576 = vst [vmem:[%s132 + $0x1d8] sm:$0xff] %v448
        %577 = vst [vmem:[%s132 + $0x1e0] sm:$0xff] %v449
        %578 = vst [vmem:[%s132 + $0x1e8] sm:$0xff] %v450
        %579 = vst [vmem:[%s132 + $0x1f0] sm:$0xff] %v451
        %580 = vst [vmem:[%s132 + $0x1f8] sm:$0xff] %v452
        %581 = vst [vmem:[%s132 + $0x200] sm:$0xff] %v453
        %582 = vst [vmem:[%s132 + $0x208] sm:$0xff] %v454
        %583 = vst [vmem:[%s132 + $0x210] sm:$0xff] %v455
        %584 = vst [vmem:[%s132 + $0x218] sm:$0xff] %v456
        %585 = vst [vmem:[%s132 + $0x220] sm:$0xff] %v457
        %586 = vst [vmem:[%s132 + $0x228] sm:$0xff] %v458
        %587 = vst [vmem:[%s132 + $0x230] sm:$0xff] %v459
        %588 = vst [vmem:[%s132 + $0x238] sm:$0xff] %v460
        %589 = vst [vmem:[%s132 + $0x240] sm:$0xff] %v461
        %590 = vst [vmem:[%s132 + $0x248] sm:$0xff] %v462
        %591 = vst [vmem:[%s132 + $0x250] sm:$0xff] %v463
        %592 = vst [vmem:[%s132 + $0x258] sm:$0xff] %v464
        %593 = vst [vmem:[%s132 + $0x260] sm:$0xff] %v465
        %594 = vst [vmem:[%s132 + $0x268] sm:$0xff] %v466
        %595 = vst [vmem:[%s132 + $0x270] sm:$0xff] %v467
        %596 = vst [vmem:[%s132 + $0x278] sm:$0xff] %v468
        %597 = vst [vmem:[%s132 + $0x280] sm:$0xff] %v469
        %598 = vst [vmem:[%s132 + $0x288] sm:$0xff] %v470
        %599 = vst [vmem:[%s132 + $0x290] sm:$0xff] %v471
        %600 = vst [vmem:[%s132 + $0x298] sm:$0xff] %v472
        %601 = vst [vmem:[%s132 + $0x2a0] sm:$0xff] %v473
        %602 = vst [vmem:[%s132 + $0x2a8] sm:$0xff] %v474
        %603 = vst [vmem:[%s132 + $0x2b0] sm:$0xff] %v475
        %604 = vst [vmem:[%s132 + $0x2b8] sm:$0xff] %v476
        %605 = vst [vmem:[%s132 + $0x2c0] sm:$0xff] %v477
        %606 = vst [vmem:[%s132 + $0x2c8] sm:$0xff] %v478
        %607 = vst [vmem:[%s132 + $0x2d0] sm:$0xff] %v479
        %608 = vst [vmem:[%s132 + $0x2d8] sm:$0xff] %v480
        %609 = vst [vmem:[%s132 + $0x2e0] sm:$0xff] %v481
        %610 = vst [vmem:[%s132 + $0x2e8] sm:$0xff] %v482
        %611 = vst [vmem:[%s132 + $0x2f0] sm:$0xff] %v483
        %612 = vst [vmem:[%s132 + $0x2f8] sm:$0xff] %v484
        %613 = vst [vmem:[%s132 + $0x300] sm:$0xff] %v485
        %614 = vst [vmem:[%s132 + $0x308] sm:$0xff] %v486
        %615 = vst [vmem:[%s132 + $0x310] sm:$0xff] %v487
        %616 = vst [vmem:[%s132 + $0x318] sm:$0xff] %v488
        %617 = vst [vmem:[%s132 + $0x320] sm:$0xff] %v489
        %618 = vst [vmem:[%s132 + $0x328] sm:$0xff] %v490
        %619 = vst [vmem:[%s132 + $0x330] sm:$0xff] %v491
        %620 = vst [vmem:[%s132 + $0x338] sm:$0xff] %v492
        %621 = vst [vmem:[%s132 + $0x340] sm:$0xff] %v493
        %622 = vst [vmem:[%s132 + $0x348] sm:$0xff] %v494
        %623 = vst [vmem:[%s132 + $0x350] sm:$0xff] %v495
        %624 = vst [vmem:[%s132 + $0x358] sm:$0xff] %v496
        %625 = vst [vmem:[%s132 + $0x360] sm:$0xff] %v497
        %626 = vst [vmem:[%s132 + $0x368] sm:$0xff] %v498
        %627 = vst [vmem:[%s132 + $0x370] sm:$0xff] %v499
        %628 = vst [vmem:[%s132 + $0x378] sm:$0xff] %v500
        %629 = vst [vmem:[%s132 + $0x380] sm:$0xff] %v501
        %630 = vst [vmem:[%s132 + $0x388] sm:$0xff] %v502
        %631 = vst [vmem:[%s132 + $0x390] sm:$0xff] %v503
        %632 = vst [vmem:[%s132 + $0x398] sm:$0xff] %v504
        %633 = vst [vmem:[%s132 + $0x3a0] sm:$0xff] %v505
        %634 = vst [vmem:[%s132 + $0x3a8] sm:$0xff] %v506
        %635 = vst [vmem:[%s132 + $0x3b0] sm:$0xff] %v507
        %636 = vst [vmem:[%s132 + $0x3b8] sm:$0xff] %v508
        %637 = vst [vmem:[%s132 + $0x3c0] sm:$0xff] %v509
        %638 = vst [vmem:[%s132 + $0x3c8] sm:$0xff] %v510
        %639 = vst [vmem:[%s132 + $0x3d0] sm:$0xff] %v511
        %640 = vst [vmem:[%s132 + $0x3d8] sm:$0xff] %v512
        %641 = vst [vmem:[%s132 + $0x3e0] sm:$0xff] %v513
        %642 = vst [vmem:[%s132 + $0x3e8] sm:$0xff] %v514
        %643 = vst [vmem:[%s132 + $0x3f0] sm:$0xff] %v515
        %644 = vst [vmem:[%s132 + $0x3f8] sm:$0xff] %v516
        %s645 = sand.u32 %s52, 1
        %s646 = scalar_lea.sflag [#allocation4], %s645
        %s647 = sand.u32 %s52, 1
        %s648 = smul.addr %s647, 1024
        %s649 = scalar_lea.vmem [#allocation5], %s648
        // Predicated region
        $region29: #{tpu_custom_call.1} parent=23 // pred_check
          %p650 = pneg %p62
        $region30: #{tpu_custom_call.1} parent=23 // pred_check_branch
          %652 = sbr.rel (%p650) target = $region32
        $region31: #{tpu_custom_call.1} parent=23 // pred_region
          %s654 = ssub.s32 16384, 16384
          %655 = vsyncadd %s646, %s654
          %s656 = smul.addr %s18, 128
          %s657 = smul.addr %s656, 128
          %s658 = scalar_lea.hbm %s1, %s657
          %s660 = sshll.u32 %s649, 4
          %s661 = int_to_ptr.vmem [resolvable:$true] %s660
          %663 = dma.vmem_to_hbm [thread:$0]  %s661, 16384, %s658, %s646
        $region32: #{tpu_custom_call.1} parent=23 // pred_fallthru
          _
      $region24: #{tpu_custom_call.1} parent=5 // pred_fallthru
        _
      %p664 = scmp.le.s32.totalorder 2, %s13
      // Predicated region
      $region33: #{tpu_custom_call.1} parent=5 // pred_check
        %p665 = pneg %p664
      $region34: #{tpu_custom_call.1} parent=5 // pred_check_branch
        %667 = sbr.rel (%p665) target = $region36
      $region35: #{tpu_custom_call.1} parent=5 // pred_region
        %s668 = ssub.s32 %s13, 2
        // Predicated region
        $region37: #{tpu_custom_call.1} parent=35 // pred_check
          %p669 = pneg %p68
        $region38: #{tpu_custom_call.1} parent=35 // pred_check_branch
          %671 = sbr.rel (%p669) target = $region40
        $region39: #{tpu_custom_call.1} parent=35 // pred_region
          %s672 = sand.u32 %s53, 1
          %s673 = scalar_lea.sflag [#allocation4], %s672
          %s674 = sand.u32 %s53, 1
          %s675 = smul.addr %s674, 1024
          %s676 = scalar_lea.vmem [#allocation5], %s675
          %677 = dma.done %s673, 16384
        $region40: #{tpu_custom_call.1} parent=35 // pred_fallthru
          _
      $region36: #{tpu_custom_call.1} parent=5 // pred_fallthru
        _
    $region6: #{tpu_custom_call.1} parent=1 // loop_footer
      %s17 = sadd.s32 1, %s13
    $region7: #{tpu_custom_call.1} parent=1 // loop_footer_branch
      %12 = sbr.rel target = $region3
    $region8: #{tpu_custom_call.1} parent=1 // loop_exit
      _
    %678 = vsyncpa [#allocation3], 1
    %s679 = scalar_lea.sflag [#allocation3], 1
    %680 = vsyncpa %s679, 1
    %681 = vsyncpa [#allocation4], 1
    %s682 = scalar_lea.sflag [#allocation4], 1
    %683 = vsyncpa %s682, 1

</llo_original>
